<compile_context>
chip_gen: v5e
topology: v5e:2x2
jax: 0.10.0
libtpu: 0.0.40
codegen_flags: <defaults>
</compile_context>

<pallas_src>
import functools
import math

import jax
import jax.numpy as jnp
from jax import lax
from jax.experimental import pallas as pl
from jax.experimental.pallas import tpu as pltpu


def _round_up(x: int, m: int) -> int:
    return ((x + m - 1) // m) * m


def _flash_attention_kernel(q_ref, k_ref, v_ref, o_ref, m_sc, l_sc, acc_sc,
                            *, scale, num_keys, tk, mask_keys):
    """One (batch, q-tile) accumulates over the kv-tile grid axis (last, arbitrary)."""
    kv = pl.program_id(2)

    @pl.when(kv == 0)
    def _init():
        m_sc[...] = jnp.full_like(m_sc, -jnp.inf)
        l_sc[...] = jnp.zeros_like(l_sc)
        acc_sc[...] = jnp.zeros_like(acc_sc)

    # Keep operands in their native dtype (bf16 stays on the fast MXU path);
    # accumulate in f32 via preferred_element_type.
    q = q_ref[0]                       # (tq, Dp)
    k = k_ref[0]                       # (tk, Dp)
    v = v_ref[0]                       # (tk, Dp)

    # Fold 1/sqrt(d_model) into q: tq*D multiplies instead of tq*tk.
    qs = q * scale

    # scores = q @ k^T without an explicit transpose: contract over D directly.
    scores = lax.dot_general(qs, k, (((1,), (1,)), ((), ())),
                             preferred_element_type=jnp.float32)   # (tq, tk)

    if mask_keys:
        # Mask out zero-padded key positions (only emitted when padding exists).
        key_idx = kv * tk + lax.broadcasted_iota(jnp.int32, scores.shape, 1)
        scores = jnp.where(key_idx < num_keys, scores, -1e30)

    # Online softmax update.
    m_prev = m_sc[...]
    m_new = jnp.maximum(m_prev, scores.max(axis=-1, keepdims=True))
    alpha = jnp.exp(m_prev - m_new)
    p = jnp.exp(scores - m_new)                                     # (tq, tk) f32

    l_sc[...] = alpha * l_sc[...] + p.sum(axis=-1, keepdims=True)
    acc_sc[...] = alpha * acc_sc[...] + jnp.dot(
        p.astype(v.dtype), v, preferred_element_type=jnp.float32)   # (tq, Dp)
    m_sc[...] = m_new

    @pl.when(kv == pl.num_programs(2) - 1)
    def _finalize():
        # Deferred normalization: one (tq, 1) reciprocal + (tq, Dp) multiply.
        # approx=False keeps full accuracy (approx=True is a further EUP micro-opt).
        inv_l = pl.reciprocal(l_sc[...], approx=False)
        o_ref[0] = (acc_sc[...] * inv_l).astype(o_ref.dtype)


def simple_attention(queries, keys, values, d_model, *, tq=128, tk=256,
                     vmem_limit_bytes=32 * 1024 * 1024):
    """Pallas TPU implementation of SimpleAttention.forward."""
    B, Nq, D = queries.shape
    _, Nk, _ = keys.shape
    assert D == d_model
    assert keys.shape == (B, Nk, D) and values.shape == (B, Nk, D)

    # Lane-align D (multiple of 128) and sublane-align the sequence tiles.
    Dp = _round_up(D, 128)
    tq = min(tq, _round_up(Nq, 8))
    tk = min(tk, _round_up(Nk, 8))
    Nq_p = _round_up(Nq, tq)
    Nk_p = _round_up(Nk, tk)

    q_p = jnp.pad(queries, ((0, 0), (0, Nq_p - Nq), (0, Dp - D)))
    k_p = jnp.pad(keys, ((0, 0), (0, Nk_p - Nk), (0, Dp - D)))
    v_p = jnp.pad(values, ((0, 0), (0, Nk_p - Nk), (0, Dp - D)))

    scale = 1.0 / math.sqrt(float(d_model))
    mask_keys = Nk_p != Nk

    kernel = functools.partial(
        _flash_attention_kernel,
        scale=scale, num_keys=Nk, tk=tk, mask_keys=mask_keys)

    grid = (B, Nq_p // tq, Nk_p // tk)

    itemsize = jnp.dtype(queries.dtype).itemsize
    cost = pl.CostEstimate(
        flops=4 * B * Nq * Nk * D,
        transcendentals=B * Nq * Nk,
        bytes_accessed=(queries.size + keys.size + values.size + B * Nq * D)
        * itemsize,
    )

    out_p = pl.pallas_call(
        kernel,
        out_shape=jax.ShapeDtypeStruct((B, Nq_p, Dp), queries.dtype),
        grid_spec=pltpu.PrefetchScalarGridSpec(
            num_scalar_prefetch=0,
            grid=grid,
            in_specs=[
                pl.BlockSpec((1, tq, Dp), lambda b, qi, kv: (b, qi, 0)),
                pl.BlockSpec((1, tk, Dp), lambda b, qi, kv: (b, kv, 0)),
                pl.BlockSpec((1, tk, Dp), lambda b, qi, kv: (b, kv, 0)),
            ],
            out_specs=pl.BlockSpec((1, tq, Dp), lambda b, qi, kv: (b, qi, 0)),
            scratch_shapes=[
                pltpu.VMEM((tq, 1), jnp.float32),    # running max m
                pltpu.VMEM((tq, 1), jnp.float32),    # running denominator l
                pltpu.VMEM((tq, Dp), jnp.float32),   # output accumulator
            ],
        ),
        compiler_params=pltpu.CompilerParams(
            dimension_semantics=("parallel", "parallel", "arbitrary"),
            vmem_limit_bytes=vmem_limit_bytes,
        ),
        cost_estimate=cost,
    )(q_p, k_p, v_p)

    # Strip the lane/sublane padding.
    return out_p[:, :Nq, :D]


def _reference(queries, keys, values, d_model):
    scores = jnp.einsum("bqd,bkd->bqk", queries, keys) / math.sqrt(float(d_model))
    w = jax.nn.softmax(scores, axis=-1)
    return jnp.einsum("bqk,bkd->bqd", w, values)


if __name__ == "__main__":
    d_model = 5
    batch_size = 2
    num_keys = 4
    num_queries = 3

    key = jax.random.PRNGKey(0)
    kq, kk, kv = jax.random.split(key, 3)
    queries = jax.random.uniform(kq, (batch_size, num_queries, d_model), dtype=jnp.float32)
    keys = jax.random.uniform(kk, (batch_size, num_keys, d_model), dtype=jnp.float32)
    values = jax.random.uniform(kv, (batch_size, num_keys, d_model), dtype=jnp.float32)

    out = simple_attention(queries, keys, values, d_model)
    out = jax.block_until_ready(out)

    ref = _reference(queries, keys, values, d_model)
    assert out.shape == (batch_size, num_queries, d_model)
    assert jnp.allclose(out, ref, atol=1e-5, rtol=1e-5), "mismatch vs reference"

    print("KERNEL_OK")
</pallas_src>

<mosaic_0001>
module attributes {stable_mosaic.version = 11 : i64} {
  func.func @_flash_attention_kernel(%arg0: i32, %arg1: i32, %arg2: i32, %arg3: memref<1x8x128xf32, #tpu.memory_space<vmem>>, %arg4: memref<1x8x128xf32, #tpu.memory_space<vmem>>, %arg5: memref<1x8x128xf32, #tpu.memory_space<vmem>>, %arg6: memref<1x8x128xf32, #tpu.memory_space<vmem>>, %arg7: memref<8x1xf32, #tpu.memory_space<vmem>>, %arg8: memref<8x1xf32, #tpu.memory_space<vmem>>, %arg9: memref<8x128xf32, #tpu.memory_space<vmem>>) attributes {dimension_semantics = [#tpu.dimension_semantics<parallel>, #tpu.dimension_semantics<parallel>, #tpu.dimension_semantics<arbitrary>], iteration_bounds = array<i64: 2, 1, 1>, scalar_prefetch = 0 : i64, scratch_operands = 3 : i64, tpu.core_type = #tpu.core_type<tc>, window_params = [{transform_indices = @transform_0, window_bounds = array<i64: 1, 8, 128>}, {transform_indices = @transform_1, window_bounds = array<i64: 1, 8, 128>}, {transform_indices = @transform_2, window_bounds = array<i64: 1, 8, 128>}, {transform_indices = @transform_3, window_bounds = array<i64: 1, 8, 128>}]} {
    %c0_i32 = arith.constant 0 : i32
    %0 = arith.cmpi eq, %arg2, %c0_i32 : i32
    %1 = arith.extui %0 : i1 to i32
    %c0_i32_0 = arith.constant 0 : i32
    %2 = arith.cmpi ne, %1, %c0_i32_0 : i32
    scf.if %2 {
      %cst_28 = arith.constant 0xFF800000 : f32
      %45 = vector.broadcast %cst_28 : f32 to vector<8x1xf32>
      %c0_29 = arith.constant 0 : index
      %c0_30 = arith.constant 0 : index
      %46 = vector.load %arg7[%c0_29, %c0_30] : memref<8x1xf32, #tpu.memory_space<vmem>>, vector<8x1xf32>
      tpu.vector_store %arg7[%c0_29, %c0_30], %45 {strides = array<i32>} : memref<8x1xf32, #tpu.memory_space<vmem>>, vector<8x1xf32>,
      %cst_31 = arith.constant 0.000000e+00 : f32
      %47 = vector.broadcast %cst_31 : f32 to vector<8x1xf32>
      %c0_32 = arith.constant 0 : index
      %c0_33 = arith.constant 0 : index
      %48 = vector.load %arg8[%c0_32, %c0_33] : memref<8x1xf32, #tpu.memory_space<vmem>>, vector<8x1xf32>
      tpu.vector_store %arg8[%c0_32, %c0_33], %47 {strides = array<i32>} : memref<8x1xf32, #tpu.memory_space<vmem>>, vector<8x1xf32>,
      %cst_34 = arith.constant 0.000000e+00 : f32
      %49 = vector.broadcast %cst_34 : f32 to vector<8x128xf32>
      %c0_35 = arith.constant 0 : index
      %c0_36 = arith.constant 0 : index
      %50 = vector.load %arg9[%c0_35, %c0_36] : memref<8x128xf32, #tpu.memory_space<vmem>>, vector<8x128xf32>
      tpu.vector_store %arg9[%c0_35, %c0_36], %49 {strides = array<i32>} : memref<8x128xf32, #tpu.memory_space<vmem>>, vector<8x128xf32>,
    } else {
    }
    %c0 = arith.constant 0 : index
    %c0_1 = arith.constant 0 : index
    %c0_2 = arith.constant 0 : index
    %3 = vector.load %arg3[%c0, %c0_1, %c0_2] : memref<1x8x128xf32, #tpu.memory_space<vmem>>, vector<1x8x128xf32>
    %4 = vector.shape_cast %3 : vector<1x8x128xf32> to vector<8x128xf32>
    %c0_3 = arith.constant 0 : index
    %c0_4 = arith.constant 0 : index
    %c0_5 = arith.constant 0 : index
    %5 = vector.load %arg4[%c0_3, %c0_4, %c0_5] : memref<1x8x128xf32, #tpu.memory_space<vmem>>, vector<1x8x128xf32>
    %6 = vector.shape_cast %5 : vector<1x8x128xf32> to vector<8x128xf32>
    %c0_6 = arith.constant 0 : index
    %c0_7 = arith.constant 0 : index
    %c0_8 = arith.constant 0 : index
    %7 = vector.load %arg5[%c0_6, %c0_7, %c0_8] : memref<1x8x128xf32, #tpu.memory_space<vmem>>, vector<1x8x128xf32>
    %8 = vector.shape_cast %7 : vector<1x8x128xf32> to vector<8x128xf32>
    %cst = arith.constant 0.44721359 : f32
    %9 = vector.broadcast %cst : f32 to vector<8x128xf32>
    %10 = arith.mulf %4, %9 : vector<8x128xf32>
    %cst_9 = arith.constant dense<0.000000e+00> : vector<8x8xf32>
    %11 = tpu.matmul %10, %6, %cst_9 {dimension_numbers = #tpu.dot_dimension_numbers<[1], [1], [0], [0], [0, 0, 1, 0], [], []>} : vector<8x128xf32>, vector<8x128xf32>, vector<8x8xf32> -> vector<8x8xf32>
    %c8_i32 = arith.constant 8 : i32
    %12 = arith.muli %arg2, %c8_i32 : i32
    %13 = tpu.iota {dimensions = array<i32: 1>} : vector<8x8xi32>
    %14 = vector.broadcast %12 : i32 to vector<8x8xi32>
    %15 = arith.addi %14, %13 : vector<8x8xi32>
    %c4_i32 = arith.constant 4 : i32
    %16 = vector.broadcast %c4_i32 : i32 to vector<8x8xi32>
    %17 = arith.cmpi slt, %15, %16 : vector<8x8xi32>
    %cst_10 = arith.constant -1.000000e+30 : f32
    %18 = vector.broadcast %cst_10 : f32 to vector<8x8xf32>
    %19 = arith.select %17, %11, %18 : vector<8x8xi1>, vector<8x8xf32>
    %c0_11 = arith.constant 0 : index
    %c0_12 = arith.constant 0 : index
    %20 = vector.load %arg7[%c0_11, %c0_12] : memref<8x1xf32, #tpu.memory_space<vmem>>, vector<8x1xf32>
    %cst_13 = arith.constant dense<0xFF800000> : vector<8xf32>
    %21 = vector.multi_reduction <maximumf>, %19, %cst_13 [1] : vector<8x8xf32> to vector<8xf32>
    %22 = vector.shape_cast %21 : vector<8xf32> to vector<8x1xf32>
    %23 = arith.maximumf %20, %22 : vector<8x1xf32>
    %24 = arith.subf %20, %23 : vector<8x1xf32>
    %25 = math.exp %24 : vector<8x1xf32>
    %26 = vector.broadcast %23 : vector<8x1xf32> to vector<8x8xf32>
    %27 = arith.subf %19, %26 : vector<8x8xf32>
    %28 = math.exp %27 : vector<8x8xf32>
    %c0_14 = arith.constant 0 : index
    %c0_15 = arith.constant 0 : index
    %29 = vector.load %arg8[%c0_14, %c0_15] : memref<8x1xf32, #tpu.memory_space<vmem>>, vector<8x1xf32>
    %30 = arith.mulf %25, %29 : vector<8x1xf32>
    %cst_16 = arith.constant dense<0.000000e+00> : vector<8xf32>
    %31 = vector.multi_reduction <add>, %28, %cst_16 [1] : vector<8x8xf32> to vector<8xf32>
    %32 = vector.shape_cast %31 : vector<8xf32> to vector<8x1xf32>
    %33 = arith.addf %30, %32 : vector<8x1xf32>
    %c0_17 = arith.constant 0 : index
    %c0_18 = arith.constant 0 : index
    %34 = vector.load %arg8[%c0_17, %c0_18] : memref<8x1xf32, #tpu.memory_space<vmem>>, vector<8x1xf32>
    tpu.vector_store %arg8[%c0_17, %c0_18], %33 {strides = array<i32>} : memref<8x1xf32, #tpu.memory_space<vmem>>, vector<8x1xf32>,
    %c0_19 = arith.constant 0 : index
    %c0_20 = arith.constant 0 : index
    %35 = vector.load %arg9[%c0_19, %c0_20] : memref<8x128xf32, #tpu.memory_space<vmem>>, vector<8x128xf32>
    %36 = vector.broadcast %25 : vector<8x1xf32> to vector<8x128xf32>
    %37 = arith.mulf %36, %35 : vector<8x128xf32>
    %cst_21 = arith.constant dense<0.000000e+00> : vector<8x128xf32>
    %38 = tpu.matmul %28, %8, %cst_21 {dimension_numbers = #tpu.dot_dimension_numbers<[1], [0], [0], [1], [0, 0, 1, 1], [], []>} : vector<8x8xf32>, vector<8x128xf32>, vector<8x128xf32> -> vector<8x128xf32>
    %39 = arith.addf %37, %38 : vector<8x128xf32>
    %c0_22 = arith.constant 0 : index
    %c0_23 = arith.constant 0 : index
    %40 = vector.load %arg9[%c0_22, %c0_23] : memref<8x128xf32, #tpu.memory_space<vmem>>, vector<8x128xf32>
    tpu.vector_store %arg9[%c0_22, %c0_23], %39 {strides = array<i32>} : memref<8x128xf32, #tpu.memory_space<vmem>>, vector<8x128xf32>,
    %c0_24 = arith.constant 0 : index
    %c0_25 = arith.constant 0 : index
    %41 = vector.load %arg7[%c0_24, %c0_25] : memref<8x1xf32, #tpu.memory_space<vmem>>, vector<8x1xf32>
    tpu.vector_store %arg7[%c0_24, %c0_25], %23 {strides = array<i32>} : memref<8x1xf32, #tpu.memory_space<vmem>>, vector<8x1xf32>,
    %c0_i32_26 = arith.constant 0 : i32
    %42 = arith.cmpi eq, %arg2, %c0_i32_26 : i32
    %43 = arith.extui %42 : i1 to i32
    %c0_i32_27 = arith.constant 0 : i32
    %44 = arith.cmpi ne, %43, %c0_i32_27 : i32
    scf.if %44 {
      %c0_28 = arith.constant 0 : index
      %c0_29 = arith.constant 0 : index
      %45 = vector.load %arg8[%c0_28, %c0_29] : memref<8x1xf32, #tpu.memory_space<vmem>>, vector<8x1xf32>
      %46 = tpu.reciprocal %45 : vector<8x1xf32> -> vector<8x1xf32>
      %c0_30 = arith.constant 0 : index
      %c0_31 = arith.constant 0 : index
      %47 = vector.load %arg9[%c0_30, %c0_31] : memref<8x128xf32, #tpu.memory_space<vmem>>, vector<8x128xf32>
      %48 = vector.broadcast %46 : vector<8x1xf32> to vector<8x128xf32>
      %49 = arith.mulf %47, %48 : vector<8x128xf32>
      %c0_32 = arith.constant 0 : index
      %c0_33 = arith.constant 0 : index
      %c0_34 = arith.constant 0 : index
      %50 = vector.load %arg6[%c0_32, %c0_33, %c0_34] : memref<1x8x128xf32, #tpu.memory_space<vmem>>, vector<1x8x128xf32>
      %51 = vector.shape_cast %50 : vector<1x8x128xf32> to vector<8x128xf32>
      %52 = vector.shape_cast %49 : vector<8x128xf32> to vector<1x8x128xf32>
      tpu.vector_store %arg6[%c0_32, %c0_33, %c0_34], %52 {strides = array<i32>} : memref<1x8x128xf32, #tpu.memory_space<vmem>>, vector<1x8x128xf32>,
    } else {
    }
    return
  }
  func.func @transform_0(%arg0: i32, %arg1: i32, %arg2: i32) -> (i32, i32, i32) {
    %c0_i32 = arith.constant 0 : i32
    %c0_i32_0 = arith.constant 0 : i32
    return %arg0, %arg1, %c0_i32 : i32, i32, i32
  }
  func.func @transform_1(%arg0: i32, %arg1: i32, %arg2: i32) -> (i32, i32, i32) {
    %c0_i32 = arith.constant 0 : i32
    %c0_i32_0 = arith.constant 0 : i32
    return %arg0, %arg2, %c0_i32 : i32, i32, i32
  }
  func.func @transform_2(%arg0: i32, %arg1: i32, %arg2: i32) -> (i32, i32, i32) {
    %c0_i32 = arith.constant 0 : i32
    %c0_i32_0 = arith.constant 0 : i32
    return %arg0, %arg2, %c0_i32 : i32, i32, i32
  }
  func.func @transform_3(%arg0: i32, %arg1: i32, %arg2: i32) -> (i32, i32, i32) {
    %c0_i32 = arith.constant 0 : i32
    %c0_i32_0 = arith.constant 0 : i32
    return %arg0, %arg1, %c0_i32 : i32, i32, i32
  }
}

</mosaic_0001>

<llo_original>
// kernel: tpu_custom_call.1
$region0: #{tpu_custom_call.1}
  #allocation0 [shape = 'u32[]', space=smem, size = 0x4, offset = 0x4, fixed_abs, tag = 'smem constant byte address 0x4 - core index']
  #allocation1 [shape = 'u32[72,128]{1,0:T(1,128)}', space=vmem, size = 0x9000, scoped, tag = 'internal scratch']
  #allocation2 [shape = 'f32[8,1]{1,0:T(8,128)}', space=vmem, size = 0x1000, scoped, tag = 'scratch operand']
  #allocation3 [shape = 'f32[8,1]{1,0:T(8,128)}', space=vmem, size = 0x1000, scoped, tag = 'scratch operand']
  #allocation4 [shape = 'f32[8,128]{1,0:T(8,128)}', space=vmem, size = 0x1000, scoped, tag = 'scratch operand']
  %s0 = inlined_call_operand.hbm [shape: f32[2,8,128], index: 0, kind: input, shape index: {}]
  %s1 = inlined_call_operand.hbm [shape: f32[2,8,128], index: 1, kind: input, shape index: {}]
  %s2 = inlined_call_operand.hbm [shape: f32[2,8,128], index: 2, kind: input, shape index: {}]
  %s3 = inlined_call_operand.hbm [shape: f32[2,8,128], index: 3, kind: output, shape index: {}]
  %s4 = sld [smem:[#allocation0]]
  $region65: #{tpu_custom_call.1} parent=0
    _
  %s6 = ssub.s32 1, %s4
  %s7 = scalar_select 0, %s6, %s4
  $region1: #{tpu_custom_call.1} parent=0
    #allocation5 [shape = 'u8[8192]{0}', space=vmem, size = 0x2000, scoped, tag = 'input window, operand 0']
    #allocation6 [shape = 's32[2]{0}', space=sflag, size = 0x8, scoped, tag = 'scoped memory for tpu_custom_call.1']
    #allocation7 [shape = 's32[2]{0}', space=sflag, size = 0x8, scoped, tag = 'scoped memory for tpu_custom_call.1']
    #allocation8 [shape = 'u8[8192]{0}', space=vmem, size = 0x2000, scoped, tag = 'input window, operand 1']
    #allocation9 [shape = 's32[2]{0}', space=sflag, size = 0x8, scoped, tag = 'scoped memory for tpu_custom_call.1']
    #allocation10 [shape = 'u8[8192]{0}', space=vmem, size = 0x2000, scoped, tag = 'input window, operand 2']
    #allocation11 [shape = 'u8[8192]{0}', space=vmem, size = 0x2000, scoped, tag = 'output window, operand 0']
    %8 = vsyncpa [#allocation6], 0
    %s9 = scalar_lea.sflag [#allocation6], 1
    %10 = vsyncpa %s9, 0
    %11 = vsyncpa [#allocation9], 0
    %s12 = scalar_lea.sflag [#allocation9], 1
    %13 = vsyncpa %s12, 0
    %14 = vsyncpa [#allocation7], 0
    %s15 = scalar_lea.sflag [#allocation7], 1
    %16 = vsyncpa %s15, 0
    loop: start=0, step=1, limit=4
    $region2: #{tpu_custom_call.1} parent=1 // loop_pre_header
      _
    $region3: #{tpu_custom_call.1} parent=1 // loop_header
      %s18 = sphi 0, %s22
      %p19 = scmp.ge.s32.totalorder %s18, 4
      %s25 = sphi 0, %s44
      %s26 = sphi 0, %s40
      %s27 = sphi 0, %s36
      %s28 = sphi 0, %s25
      %s29 = sphi 0, %s26
      %s30 = sphi 0, %s27
      %s31 = sphi 0, %s28
      %s32 = sphi 0, %s29
      %s33 = sphi 0, %s30
      %s49 = sphi 0, %s51
      %s52 = sphi 0, %s49
      %s53 = sphi 0, %s52
      %s69 = sphi 0, %s53
      %s77 = sphi 0, %s79
      %s80 = sphi 0, %s77
      %s81 = sphi 0, %s80
      %s97 = sphi 0, %s81
      %s105 = sphi 0, %s107
      %s108 = sphi 0, %s105
      %s109 = sphi 0, %s108
      %s125 = sphi 0, %s109
      %s133 = sphi 0, %s135
      %s136 = sphi 0, %s133
      %s137 = sphi 0, %s136
      %s153 = sphi 0, %s137
    $region4: #{tpu_custom_call.1} parent=1 // loop_header_branch
      %21 = sbr.rel (%p19) target = $region8
    $region5: #{tpu_custom_call.1} parent=1 // loop_body
      %s23 = ssub.s32 %s18, 1
      %s24 = ssub.s32 %s18, 2
      %s34 = sadd.s32 1, %s27
      %p35 = scmp.ge.s32.totalorder %s34, 1
      %s36 = scalar_select %p35, 0, %s34
      %s37 = sadd.s32 1, %s26
      %s38 = scalar_select %p35, %s37, %s26
      %p39 = scmp.ge.s32.totalorder %s38, 1
      %s40 = scalar_select %p39, 0, %s38
      %s41 = sadd.s32 1, %s25
      %s42 = scalar_select %p39, %s41, %s25
      %p43 = scmp.ge.s32.totalorder %s42, 2
      %s44 = scalar_select %p43, 0, %s42
      %s45 = ssub.s32 %s25, %s44
      %s46 = ssub.s32 %s26, %s40
      %s47 = sor.u32 %s45, %s46
      %p48 = scmp.eq.s32.totalorder %s47, 0
      %s50 = sadd.s32 %s49, 1
      %s51 = scalar_select %p48, %s49, %s50
      %p54 = pneg %p48
      %p55 = scmp.eq.s32.totalorder %s18, 1
      %p56 = por %p54, %p55
      %p57 = scmp.ne.s32.totalorder %s49, %s52
      %p58 = scmp.eq.s32.totalorder %s18, 0
      %p59 = por %p57, %p58
      %p60 = scmp.ne.s32.totalorder %s49, %s52
      %p61 = scmp.eq.s32.totalorder %s23, 1
      %p62 = por %p60, %p61
      %p63 = scmp.ne.s32.totalorder %s52, %s53
      %p64 = scmp.eq.s32.totalorder %s23, 0
      %p65 = por %p63, %p64
      %p66 = scmp.ne.s32.totalorder %s52, %s53
      %p67 = scmp.eq.s32.totalorder %s24, 1
      %p68 = por %p66, %p67
      %p70 = scmp.ne.s32.totalorder %s53, %s69
      %p71 = scmp.eq.s32.totalorder %s24, 0
      %p72 = por %p70, %p71
      %s73 = ssub.s32 %s25, %s44
      %s74 = ssub.s32 %s27, %s36
      %s75 = sor.u32 %s73, %s74
      %p76 = scmp.eq.s32.totalorder %s75, 0
      %s78 = sadd.s32 %s77, 1
      %s79 = scalar_select %p76, %s77, %s78
      %p82 = pneg %p76
      %p83 = scmp.eq.s32.totalorder %s18, 1
      %p84 = por %p82, %p83
      %p85 = scmp.ne.s32.totalorder %s77, %s80
      %p86 = scmp.eq.s32.totalorder %s18, 0
      %p87 = por %p85, %p86
      %p88 = scmp.ne.s32.totalorder %s77, %s80
      %p89 = scmp.eq.s32.totalorder %s23, 1
      %p90 = por %p88, %p89
      %p91 = scmp.ne.s32.totalorder %s80, %s81
      %p92 = scmp.eq.s32.totalorder %s23, 0
      %p93 = por %p91, %p92
      %p94 = scmp.ne.s32.totalorder %s80, %s81
      %p95 = scmp.eq.s32.totalorder %s24, 1
      %p96 = por %p94, %p95
      %p98 = scmp.ne.s32.totalorder %s81, %s97
      %p99 = scmp.eq.s32.totalorder %s24, 0
      %p100 = por %p98, %p99
      %s101 = ssub.s32 %s25, %s44
      %s102 = ssub.s32 %s27, %s36
      %s103 = sor.u32 %s101, %s102
      %p104 = scmp.eq.s32.totalorder %s103, 0
      %s106 = sadd.s32 %s105, 1
      %s107 = scalar_select %p104, %s105, %s106
      %p110 = pneg %p104
      %p111 = scmp.eq.s32.totalorder %s18, 1
      %p112 = por %p110, %p111
      %p113 = scmp.ne.s32.totalorder %s105, %s108
      %p114 = scmp.eq.s32.totalorder %s18, 0
      %p115 = por %p113, %p114
      %p116 = scmp.ne.s32.totalorder %s105, %s108
      %p117 = scmp.eq.s32.totalorder %s23, 1
      %p118 = por %p116, %p117
      %p119 = scmp.ne.s32.totalorder %s108, %s109
      %p120 = scmp.eq.s32.totalorder %s23, 0
      %p121 = por %p119, %p120
      %p122 = scmp.ne.s32.totalorder %s108, %s109
      %p123 = scmp.eq.s32.totalorder %s24, 1
      %p124 = por %p122, %p123
      %p126 = scmp.ne.s32.totalorder %s109, %s125
      %p127 = scmp.eq.s32.totalorder %s24, 0
      %p128 = por %p126, %p127
      %s129 = ssub.s32 %s25, %s44
      %s130 = ssub.s32 %s26, %s40
      %s131 = sor.u32 %s129, %s130
      %p132 = scmp.eq.s32.totalorder %s131, 0
      %s134 = sadd.s32 %s133, 1
      %s135 = scalar_select %p132, %s133, %s134
      %p138 = pneg %p132
      %p139 = scmp.eq.s32.totalorder %s18, 1
      %p140 = por %p138, %p139
      %p141 = scmp.ne.s32.totalorder %s133, %s136
      %p142 = scmp.eq.s32.totalorder %s18, 0
      %p143 = por %p141, %p142
      %p144 = scmp.ne.s32.totalorder %s133, %s136
      %p145 = scmp.eq.s32.totalorder %s23, 1
      %p146 = por %p144, %p145
      %p147 = scmp.ne.s32.totalorder %s136, %s137
      %p148 = scmp.eq.s32.totalorder %s23, 0
      %p149 = por %p147, %p148
      %p150 = scmp.ne.s32.totalorder %s136, %s137
      %p151 = scmp.eq.s32.totalorder %s24, 1
      %p152 = por %p150, %p151
      %p154 = scmp.ne.s32.totalorder %s137, %s153
      %p155 = scmp.eq.s32.totalorder %s24, 0
      %p156 = por %p154, %p155
      %p157 = scmp.le.s32.totalorder 1, %s18
      %p158 = scmp.lt.s32.totalorder %s18, 3
      %p159 = pnand %p157, %p158
      %p160 = pneg %p159
      // Predicated region
      $region9: #{tpu_custom_call.1} parent=5 // pred_check
        _
      $region10: #{tpu_custom_call.1} parent=5 // pred_check_branch
        %162 = sbr.rel (%p159) target = $region12
      $region11: #{tpu_custom_call.1} parent=5 // pred_region
        %s163 = ssub.s32 %s18, 1
      $region12: #{tpu_custom_call.1} parent=5 // pred_fallthru
        _
      %p164 = scmp.lt.s32.totalorder %s18, 2
      // Predicated region
      $region13: #{tpu_custom_call.1} parent=5 // pred_check
        %p165 = pneg %p164
      $region14: #{tpu_custom_call.1} parent=5 // pred_check_branch
        %167 = sbr.rel (%p165) target = $region16
      $region15: #{tpu_custom_call.1} parent=5 // pred_region
        // Predicated region
        $region17: #{tpu_custom_call.1} parent=15 // pred_check
          %p168 = pneg %p59
        $region18: #{tpu_custom_call.1} parent=15 // pred_check_branch
          %170 = sbr.rel (%p168) target = $region20
        $region19: #{tpu_custom_call.1} parent=15 // pred_region
          %s171 = sand.u32 %s49, 1
          %s172 = scalar_lea.sflag [#allocation6], %s171
          %s173 = sand.u32 %s49, 1
          %s174 = smul.addr %s173, 8
          %s175 = scalar_lea.vmem [#allocation5], %s174
          %177 = vsyncadd %s172, 0
          %s178 = sadd.s32 %s26, %s25
          %s179 = smul.addr %s178, 8
          %s180 = scalar_lea.hbm %s0, %s179
          %s182 = sshll.u32 %s180, 4
          %s183 = int_to_ptr.hbm [resolvable:$true] %s182
          %s184 = sshll.u32 %s175, 4
          %s185 = int_to_ptr.vmem [resolvable:$true] %s184
          %187 = dma.hbm_to_vmem [thread:$0]  %s183, 128, %s185, %s172
        $region20: #{tpu_custom_call.1} parent=15 // pred_fallthru
          _
        // Predicated region
        $region21: #{tpu_custom_call.1} parent=15 // pred_check
          %p188 = pneg %p87
        $region22: #{tpu_custom_call.1} parent=15 // pred_check_branch
          %190 = sbr.rel (%p188) target = $region24
        $region23: #{tpu_custom_call.1} parent=15 // pred_region
          %s191 = sand.u32 %s18, 1
          %s192 = scalar_lea.sflag [#allocation9], %s191
          %s193 = sand.u32 %s77, 1
          %s194 = smul.addr %s193, 8
          %s195 = scalar_lea.vmem [#allocation8], %s194
          %197 = vsyncadd %s192, 0
          %s198 = sadd.s32 %s27, %s25
          %s199 = smul.addr %s198, 8
          %s200 = scalar_lea.hbm %s1, %s199
          %s202 = sshll.u32 %s200, 4
          %s203 = int_to_ptr.hbm [resolvable:$true] %s202
          %s204 = sshll.u32 %s195, 4
          %s205 = int_to_ptr.vmem [resolvable:$true] %s204
          %207 = dma.hbm_to_vmem [thread:$0]  %s203, 128, %s205, %s192
        $region24: #{tpu_custom_call.1} parent=15 // pred_fallthru
          _
        // Predicated region
        $region25: #{tpu_custom_call.1} parent=15 // pred_check
          %p208 = pneg %p115
        $region26: #{tpu_custom_call.1} parent=15 // pred_check_branch
          %210 = sbr.rel (%p208) target = $region28
        $region27: #{tpu_custom_call.1} parent=15 // pred_region
          %s211 = sand.u32 %s18, 1
          %s212 = scalar_lea.sflag [#allocation9], %s211
          %s213 = sand.u32 %s105, 1
          %s214 = smul.addr %s213, 8
          %s215 = scalar_lea.vmem [#allocation10], %s214
          %217 = vsyncadd %s212, 0
          %s218 = sadd.s32 %s27, %s25
          %s219 = smul.addr %s218, 8
          %s220 = scalar_lea.hbm %s2, %s219
          %s222 = sshll.u32 %s220, 4
          %s223 = int_to_ptr.hbm [resolvable:$true] %s222
          %s224 = sshll.u32 %s215, 4
          %s225 = int_to_ptr.vmem [resolvable:$true] %s224
          %227 = dma.hbm_to_vmem [thread:$0]  %s223, 128, %s225, %s212
        $region28: #{tpu_custom_call.1} parent=15 // pred_fallthru
          _
      $region16: #{tpu_custom_call.1} parent=5 // pred_fallthru
        _
      %p228 = scmp.le.s32.totalorder 1, %s18
      %p229 = scmp.lt.s32.totalorder %s18, 3
      %p230 = pnand %p228, %p229
      %p231 = pneg %p230
      // Predicated region
      $region29: #{tpu_custom_call.1} parent=5 // pred_check
        _
      $region30: #{tpu_custom_call.1} parent=5 // pred_check_branch
        %233 = sbr.rel (%p230) target = $region32
      $region31: #{tpu_custom_call.1} parent=5 // pred_region
        %s234 = ssub.s32 %s18, 1
        %s235 = sand.u32 %s52, 1
        %s236 = scalar_lea.sflag [#allocation6], %s235
        %s237 = sand.u32 %s52, 1
        %s238 = smul.addr %s237, 8
        %s239 = scalar_lea.vmem [#allocation5], %s238
        // Predicated region
        $region33: #{tpu_custom_call.1} parent=31 // pred_check
          %p240 = pneg %p65
        $region34: #{tpu_custom_call.1} parent=31 // pred_check_branch
          %242 = sbr.rel (%p240) target = $region36
        $region35: #{tpu_custom_call.1} parent=31 // pred_region
          %244 = dma.done %s236, 128
        $region36: #{tpu_custom_call.1} parent=31 // pred_fallthru
          _
        %s245 = sand.u32 %s23, 1
        %s246 = scalar_lea.sflag [#allocation9], %s245
        %s247 = sand.u32 %s80, 1
        %s248 = smul.addr %s247, 8
        %s249 = scalar_lea.vmem [#allocation8], %s248
        // Predicated region
        $region37: #{tpu_custom_call.1} parent=31 // pred_check
          %p250 = pneg %p93
        $region38: #{tpu_custom_call.1} parent=31 // pred_check_branch
          %252 = sbr.rel (%p250) target = $region40
        $region39: #{tpu_custom_call.1} parent=31 // pred_region
          %254 = dma.done %s246, 128
        $region40: #{tpu_custom_call.1} parent=31 // pred_fallthru
          _
        %s255 = sand.u32 %s23, 1
        %s256 = scalar_lea.sflag [#allocation9], %s255
        %s257 = sand.u32 %s108, 1
        %s258 = smul.addr %s257, 8
        %s259 = scalar_lea.vmem [#allocation10], %s258
        // Predicated region
        $region41: #{tpu_custom_call.1} parent=31 // pred_check
          %p260 = pneg %p121
        $region42: #{tpu_custom_call.1} parent=31 // pred_check_branch
          %262 = sbr.rel (%p260) target = $region44
        $region43: #{tpu_custom_call.1} parent=31 // pred_region
          %264 = dma.done %s256, 128
        $region44: #{tpu_custom_call.1} parent=31 // pred_fallthru
          _
        %s265 = sand.u32 %s52, 1
        %s266 = scalar_lea.sflag [#allocation6], %s265
        %s267 = sand.u32 %s52, 1
        %s268 = smul.addr %s267, 8
        %s269 = scalar_lea.vmem [#allocation5], %s268
        %p270 = pneg %p65
        %p271 = pneg %p62
        %s272 = sand.u32 %s23, 1
        %s273 = scalar_lea.sflag [#allocation9], %s272
        %s274 = sand.u32 %s80, 1
        %s275 = smul.addr %s274, 8
        %s276 = scalar_lea.vmem [#allocation8], %s275
        %p277 = pneg %p93
        %p278 = pneg %p90
        %s279 = sand.u32 %s23, 1
        %s280 = scalar_lea.sflag [#allocation9], %s279
        %s281 = sand.u32 %s108, 1
        %s282 = smul.addr %s281, 8
        %s283 = scalar_lea.vmem [#allocation10], %s282
        %p284 = pneg %p121
        %p285 = pneg %p118
        %p286 = pneg %p149
        %p287 = pneg %p146
        %s288 = sand.u32 %s136, 1
        %s289 = scalar_lea.sflag [#allocation7], %s288
        %s290 = sand.u32 %s136, 1
        %s291 = smul.addr %s290, 8
        %s292 = scalar_lea.vmem [#allocation11], %s291
        %p293 = scmp.eq.s32.totalorder %s30, 0
        // Predicated region
        $region45: #{tpu_custom_call.1} parent=31 // pred_check
          %p294 = pneg %p293
        $region46: #{tpu_custom_call.1} parent=31 // pred_check_branch
          %296 = sbr.rel (%p294) target = $region48
        $region47: #{tpu_custom_call.1} parent=31 // pred_region
          %vm297 = vcmask 7168
          %298 = vst.msk [vmem:[#allocation2] sm:$0xff] %vm297, -inf
          %299 = vst.msk [vmem:[#allocation3] sm:$0xff] %vm297, 0.0
          %300 = vst [vmem:[#allocation4] sm:$0xff] 0.0
        $region48: #{tpu_custom_call.1} parent=31 // pred_fallthru
          _
        %v301 = vld [vmem:[%s239] sm:$0xff]
        %v302 = vld [vmem:[%s249] sm:$0xff]
        %v303 = vld [vmem:[%s259] sm:$0xff]
        %v304 = vmul.f32 %v301, 0.4472136
        %305 = vmatpush.xpose.msra.mxu0 0.0
        %306 = vmatpush.xpose.msra.mxu0 0.0
        %307 = vmatpush.xpose.msra.mxu0 0.0
        %308 = vmatpush.xpose.msra.mxu0 0.0
        %309 = vmatpush.xpose.msra.mxu0 0.0
        %310 = vmatpush.xpose.msra.mxu0 0.0
        %311 = vmatpush.xpose.msra.mxu0 0.0
        %312 = vmatpush.xpose.msra.mxu0 0.0
        %313 = vmatpush.xpose.msra.mxu0 0.0
        %314 = vmatpush.xpose.msra.mxu0 0.0
        %315 = vmatpush.xpose.msra.mxu0 0.0
        %316 = vmatpush.xpose.msra.mxu0 0.0
        %317 = vmatpush.xpose.msra.mxu0 0.0
        %318 = vmatpush.xpose.msra.mxu0 0.0
        %319 = vmatpush.xpose.msra.mxu0 0.0
        %320 = vmatpush.xpose.msra.mxu0 %v302
        %321 = vmatmul.f32.gmra.mxu0 %v304
        %v322 = vpop.f32.mrf.mxu0
        %v323 = vadd.f32 0.0, %v322
        %324 = vdwg.mxu0
        %s325 = smul.u32 %s30, 8
        %v326 = vlaneseq
        %v327 = vand.u32 %v326, 127
        %v328 = vstv %s325
        %v329 = vadd.s32 %v328, %v327
        %vm330 = vcmp.lt.s32.totalorder %v329, 4
        %v331 = vsel %vm330, %v323, -1e+30
        %v332 = vld [vmem:[#allocation2] sm:$0xff]
        %vm333 = vcmask 64512
        %v334 = vsel %vm333, %v331, -inf
        %335 = vmax.xlane.f32.xlu0 %v334
        %v336 = vpop.xlane.xlu0 %335
        %v337 = vmax.f32 %v332, %v336
        %v338 = vsub.f32 %v332, %v337
        %v339 = vmul.f32 %v338, 1.442695
        %v340 = vpow.pop %v339
        %342 = vset.pattern.permute.xlu0 0
        %343 = vperm.xlu0 %342, %v337
        %v344 = vpop.permute.xlu0 %343
        %v346 = vsub.f32 %v331, %v344
        %v347 = vmul.f32 %v346, 1.442695
        %v348 = vpow.pop %v347
        %v349 = vld [vmem:[#allocation3] sm:$0xff]
        %v350 = vmul.f32 %v340, %v349
        %v351 = vsel %vm333, %v348, 0.0
        %352 = vadd.xlane.f32.xlu0 %v351
        %v353 = vpop.xlane.xlu0 %352
        %v354 = vadd.f32 %v350, %v353
        %vm355 = vcmask 7168
        %356 = vst.msk [vmem:[#allocation3] sm:$0xff] %vm355, %v354
        %v357 = vld [vmem:[#allocation4] sm:$0xff]
        %359 = vset.pattern.permute.xlu0 0
        %360 = vperm.xlu0 %359, %v340
        %v361 = vpop.permute.xlu0 %360
        %v363 = vmul.f32 %v361, %v357
        %v365 = vsel %vm333, %v348, 0
        %367 = vmatpush.msra.mxu0 0.0
        %368 = vmatpush.msra.mxu0 0.0
        %369 = vmatpush.msra.mxu0 0.0
        %370 = vmatpush.msra.mxu0 0.0
        %371 = vmatpush.msra.mxu0 0.0
        %372 = vmatpush.msra.mxu0 0.0
        %373 = vmatpush.msra.mxu0 0.0
        %374 = vmatpush.msra.mxu0 0.0
        %375 = vmatpush.msra.mxu0 0.0
        %376 = vmatpush.msra.mxu0 0.0
        %377 = vmatpush.msra.mxu0 0.0
        %378 = vmatpush.msra.mxu0 0.0
        %379 = vmatpush.msra.mxu0 0.0
        %380 = vmatpush.msra.mxu0 0.0
        %381 = vmatpush.msra.mxu0 0.0
        %382 = vmatpush.msra.mxu0 %v303
        %383 = vmatmul.f32.gmra.mxu0 %v365
        %v384 = vpop.f32.mrf.mxu0
        %v385 = vadd.f32 0.0, %v384
        %386 = vdwg.mxu0
        %v387 = vadd.f32 %v363, %v385
        %388 = vst [vmem:[#allocation4] sm:$0xff] %v387
        %389 = vst.msk [vmem:[#allocation2] sm:$0xff] %vm355, %v337
        // Predicated region
        $region49: #{tpu_custom_call.1} parent=31 // pred_check
          %p390 = pneg %p293
        $region50: #{tpu_custom_call.1} parent=31 // pred_check_branch
          %392 = sbr.rel (%p390) target = $region52
        $region51: #{tpu_custom_call.1} parent=31 // pred_region
          %v393 = vld [vmem:[#allocation3] sm:$0xff]
          %v394 = vrcp.pop %v393
          %v395 = vmul.f32 %v393, %v394
          %v396 = vsub.f32 1.0, %v395
          %v397 = vmul.f32 %v394, %v396
          %v398 = vadd.f32 %v394, %v397
          %vm399 = vweird.f32 %v393
          %vm400 = vweird.f32 %v394
          %vm401 = vmor %vm399, %vm400
          %v402 = vsel %vm401, %v394, %v398
          %v403 = vand.u32 2147483647, %v393
          %vm404 = vcmp.eq.f32.partialorder %v403, 8.507059e+37
          %v405 = vand.u32 %v393, 2147483648
          %v406 = vor.u32 1.1754944e-38, %v405
          %v407 = vsel %vm404, %v406, %v402
          %v408 = vld [vmem:[#allocation4] sm:$0xff]
          %410 = vset.pattern.permute.xlu0 0
          %411 = vperm.xlu0 %410, %v407
          %v412 = vpop.permute.xlu0 %411
          %v414 = vmul.f32 %v408, %v412
          %415 = vst [vmem:[%s292] sm:$0xff] %v414
        $region52: #{tpu_custom_call.1} parent=31 // pred_fallthru
          _
        %s416 = sand.u32 %s136, 1
        %s417 = scalar_lea.sflag [#allocation7], %s416
        %s418 = sand.u32 %s136, 1
        %s419 = smul.addr %s418, 8
        %s420 = scalar_lea.vmem [#allocation11], %s419
        // Predicated region
        $region53: #{tpu_custom_call.1} parent=31 // pred_check
          %p421 = pneg %p146
        $region54: #{tpu_custom_call.1} parent=31 // pred_check_branch
          %423 = sbr.rel (%p421) target = $region56
        $region55: #{tpu_custom_call.1} parent=31 // pred_region
          %425 = vsyncadd %s417, 0
          %s426 = sadd.s32 %s29, %s28
          %s427 = smul.addr %s426, 8
          %s428 = scalar_lea.hbm %s3, %s427
          %s430 = sshll.u32 %s420, 4
          %s431 = int_to_ptr.vmem [resolvable:$true] %s430
          %s432 = sshll.u32 %s428, 4
          %s433 = int_to_ptr.hbm [resolvable:$true] %s432
          %435 = dma.vmem_to_hbm [thread:$0]  %s431, 128, %s433, %s417
        $region56: #{tpu_custom_call.1} parent=31 // pred_fallthru
          _
      $region32: #{tpu_custom_call.1} parent=5 // pred_fallthru
        _
      %p436 = scmp.le.s32.totalorder 2, %s18
      // Predicated region
      $region57: #{tpu_custom_call.1} parent=5 // pred_check
        %p437 = pneg %p436
      $region58: #{tpu_custom_call.1} parent=5 // pred_check_branch
        %439 = sbr.rel (%p437) target = $region60
      $region59: #{tpu_custom_call.1} parent=5 // pred_region
        %s440 = ssub.s32 %s18, 2
        // Predicated region
        $region61: #{tpu_custom_call.1} parent=59 // pred_check
          %p441 = pneg %p152
        $region62: #{tpu_custom_call.1} parent=59 // pred_check_branch
          %443 = sbr.rel (%p441) target = $region64
        $region63: #{tpu_custom_call.1} parent=59 // pred_region
          %s444 = sand.u32 %s137, 1
          %s445 = scalar_lea.sflag [#allocation7], %s444
          %s446 = sand.u32 %s137, 1
          %s447 = smul.addr %s446, 8
          %s448 = scalar_lea.vmem [#allocation11], %s447
          %450 = dma.done %s445, 128
        $region64: #{tpu_custom_call.1} parent=59 // pred_fallthru
          _
      $region60: #{tpu_custom_call.1} parent=5 // pred_fallthru
        _
    $region6: #{tpu_custom_call.1} parent=1 // loop_footer
      %s22 = sadd.s32 1, %s18
    $region7: #{tpu_custom_call.1} parent=1 // loop_footer_branch
      %17 = sbr.rel target = $region3
    $region8: #{tpu_custom_call.1} parent=1 // loop_exit
      _
    %451 = vsyncpa [#allocation6], 1
    %s452 = scalar_lea.sflag [#allocation6], 1
    %453 = vsyncpa %s452, 1
    %454 = vsyncpa [#allocation9], 1
    %s455 = scalar_lea.sflag [#allocation9], 1
    %456 = vsyncpa %s455, 1
    %457 = vsyncpa [#allocation7], 1
    %s458 = scalar_lea.sflag [#allocation7], 1
    %459 = vsyncpa %s458, 1

</llo_original>
